<compile_context>
chip_gen: v7x
topology: tpu7x:2x2x1
jax: 0.10.0
libtpu: 0.0.40
codegen_flags: <defaults>
</compile_context>

<pallas_src>
import jax
import jax.numpy as jnp
from jax.experimental import pallas as pl
from jax.experimental.pallas import tpu as pltpu


def _cat_kernel_batch(a_ref, b_ref, o_ref):
    """a_ref, b_ref: (nb, C, HW) VMEM tiles; o_ref: (nb, 2C, 2*HW) VMEM tile."""
    c = a_ref.shape[1]
    hw = a_ref.shape[2]
    # Write each quadrant directly from the ref: avoids holding the whole
    # input block live in vregs across two stores (spill-free at big blocks).
    o_ref[:, :c, :hw] = a_ref[...]
    o_ref[:, :c, hw:] = a_ref[...]
    o_ref[:, c:, :hw] = b_ref[...]
    o_ref[:, c:, hw:] = b_ref[...]


def _cat_kernel_lane_tiled(a_ref, b_ref, o_ref):
    """Fallback tile: a_ref, b_ref: (1, C, hwt); o_ref: (1, 2C, hwt)."""
    c = a_ref.shape[1]
    o_ref[:, :c, :] = a_ref[...]
    o_ref[:, c:, :] = b_ref[...]


def _vmem_capacity_bytes():
    try:
        info = pltpu.get_tpu_info()
        cap = int(getattr(info, "vmem_capacity_bytes", 0))
        if cap > 0:
            return cap
    except Exception:
        pass
    return 64 * 1024 * 1024  # v7x-safe fallback if the query is unavailable


def simple_cat_module(a, b, dimensions=(1, 2), *, force_pallas=False,
                      _vmem_budget_override=None):
    """Pallas implementation of SimpleCatModule(*dimensions) for dimensions=(1, 2)."""
    assert tuple(dimensions) == (1, 2), "kernel specialized for dimensions=(1, 2)"
    assert a.shape == b.shape and a.dtype == b.dtype and a.ndim == 4

    N, C, H, W = a.shape
    HW = H * W
    isz = jnp.dtype(a.dtype).itemsize
    out_bytes = N * (2 * C) * (2 * HW) * isz

    def _jnp_path():
        o = jnp.concatenate((a, b), axis=1)
        return jnp.concatenate((o, o), axis=2)

    # Tiny problems: dispatch + per-step overhead dominate; XLA's fused concat wins.
    if not force_pallas and out_bytes < (2 << 20):
        return _jnp_path()

    cap = _vmem_capacity_bytes()
    budget = (_vmem_budget_override if _vmem_budget_override is not None
              else (cap * 3) // 4)

    # Flatten spatial dims into the lane axis: all cat splits become lane splits.
    a3 = a.reshape(N, C, HW)
    b3 = b.reshape(N, C, HW)

    # Double-buffered VMEM footprint of one batch element:
    #   inputs 2 * C*HW, output 2C * 2HW = 4 * C*HW  => 6 * C*HW, x2 buffers.
    per_n_bytes = 2 * 6 * C * HW * isz
    nb_by_vmem = budget // max(per_n_bytes, 1)

    if nb_by_vmem >= 1:
        # ---------- Primary path: tile over batch only ----------
        # Cap nb so the grid has >= 2 steps (both v7x TensorCores participate);
        # prefer an even step count for core balance, then the largest block.
        nb_cap = max(1, min(int(nb_by_vmem), N // 2)) if N >= 2 else 1
        divisors = [d for d in range(1, nb_cap + 1) if N % d == 0]
        nb = max(divisors, key=lambda d: (((N // d) % 2 == 0), d))

        grid = (N // nb,)
        in_spec = pl.BlockSpec((nb, C, HW), lambda n: (n, 0, 0))
        out_spec = pl.BlockSpec((nb, 2 * C, 2 * HW), lambda n: (n, 0, 0))

        vmem_limit = int(min(cap, max(per_n_bytes * nb * 5 // 4 + (1 << 20),
                                      32 * 1024 * 1024)))
        cost = pl.CostEstimate(flops=0, transcendentals=0,
                               bytes_accessed=6 * N * C * HW * isz)

        out3 = pl.pallas_call(
            _cat_kernel_batch,
            out_shape=jax.ShapeDtypeStruct((N, 2 * C, 2 * HW), a.dtype),
            grid_spec=pltpu.PrefetchScalarGridSpec(
                num_scalar_prefetch=0,
                grid=grid,
                in_specs=[in_spec, in_spec],
                out_specs=out_spec,
            ),
            compiler_params=pltpu.CompilerParams(
                dimension_semantics=("parallel",),
                vmem_limit_bytes=vmem_limit,
            ),
            cost_estimate=cost,
        )(a3, b3)
        return out3.reshape(N, 2 * C, 2 * H, W)

    # ---------- Fallback path: one batch element doesn't fit the budget ----------
    # Tile the lane axis (multiples of 128 so stores stay unmasked) and add a
    # replica axis of size 2 for the dim-2 self-cat. Inputs are read twice
    # (8*C*HW traffic instead of 6*C*HW) but blocks stay budget-sized.
    n_blocks_cands = [hwt for hwt in range(128, HW + 1, 128) if HW % hwt == 0]
    hwt = None
    for cand in sorted(n_blocks_cands, reverse=True):
        if 8 * C * cand * isz <= budget:  # double-buffered in(2)+out per step
            hwt = cand
            break
    if hwt is None:
        # TODO(synk): no lane-aligned tiling fits VMEM (HW not a multiple of 128
        # or C*128 slab too large); defer to XLA's concat for these shapes.
        return _jnp_path()

    n_lane_blocks = HW // hwt
    grid = (N, 2, n_lane_blocks)
    in_spec = pl.BlockSpec((1, C, hwt), lambda n, rep, l: (n, 0, l))
    out_spec = pl.BlockSpec((1, 2 * C, hwt),
                            lambda n, rep, l: (n, 0, rep * n_lane_blocks + l))

    vmem_limit = int(min(cap, max(8 * C * hwt * isz * 5 // 4 + (1 << 20),
                                  32 * 1024 * 1024)))
    cost = pl.CostEstimate(flops=0, transcendentals=0,
                           bytes_accessed=8 * N * C * HW * isz)

    out3 = pl.pallas_call(
        _cat_kernel_lane_tiled,
        out_shape=jax.ShapeDtypeStruct((N, 2 * C, 2 * HW), a.dtype),
        grid_spec=pltpu.PrefetchScalarGridSpec(
            num_scalar_prefetch=0,
            grid=grid,
            in_specs=[in_spec, in_spec],
            out_specs=out_spec,
        ),
        compiler_params=pltpu.CompilerParams(
            dimension_semantics=("parallel", "parallel", "parallel"),
            vmem_limit_bytes=vmem_limit,
        ),
        cost_estimate=cost,
    )(a3, b3)
    return out3.reshape(N, 2 * C, 2 * H, W)


if __name__ == "__main__":
    key = jax.random.PRNGKey(0)
    ka, kb = jax.random.split(key)
    # Small NCHW inputs: batch=2, channels=4, H=8, W=128 (lane-dense last dim).
    a = jax.random.normal(ka, (2, 4, 8, 128), dtype=jnp.float32)
    b = jax.random.normal(kb, (2, 4, 8, 128), dtype=jnp.float32)

    # Pure-JAX reference of the PyTorch forward.
    ref = jnp.concatenate((a, b), axis=1)
    ref = jnp.concatenate((ref, ref), axis=2)

    # Primary (batch-tiled, flattened-lane) Pallas path.
    out = jax.block_until_ready(simple_cat_module(a, b, (1, 2), force_pallas=True))
    assert out.shape == ref.shape == (2, 8, 16, 128)
    assert jnp.allclose(out, ref)

    # Lane-tiled fallback path, forced via a tiny VMEM budget, to exercise the
    # large-feature-map code path on the same small inputs.
    out_fb = jax.block_until_ready(
        simple_cat_module(a, b, (1, 2), force_pallas=True,
                          _vmem_budget_override=64 * 1024))
    assert jnp.allclose(out_fb, ref)

    print("KERNEL_OK")
</pallas_src>

<mosaic_0001>
module attributes {stable_mosaic.version = 11 : i64} {
  func.func @_cat_kernel_batch(%arg0: i32, %arg1: memref<1x4x1024xf32, #tpu.memory_space<vmem>>, %arg2: memref<1x4x1024xf32, #tpu.memory_space<vmem>>, %arg3: memref<1x8x2048xf32, #tpu.memory_space<vmem>>) attributes {dimension_semantics = [#tpu.dimension_semantics<parallel>], iteration_bounds = array<i64: 2>, scalar_prefetch = 0 : i64, scratch_operands = 0 : i64, tpu.core_type = #tpu.core_type<tc>, window_params = [{transform_indices = @transform_0, window_bounds = array<i64: 1, 4, 1024>}, {transform_indices = @transform_1, window_bounds = array<i64: 1, 4, 1024>}, {transform_indices = @transform_2, window_bounds = array<i64: 1, 8, 2048>}]} {
    %c0 = arith.constant 0 : index
    %c0_0 = arith.constant 0 : index
    %c0_1 = arith.constant 0 : index
    %0 = vector.load %arg1[%c0, %c0_0, %c0_1] : memref<1x4x1024xf32, #tpu.memory_space<vmem>>, vector<1x4x1024xf32>
    %c0_2 = arith.constant 0 : index
    %c0_3 = arith.constant 0 : index
    %c0_4 = arith.constant 0 : index
    %1 = vector.load %arg3[%c0_2, %c0_3, %c0_4] : memref<1x8x2048xf32, #tpu.memory_space<vmem>>, vector<1x4x1024xf32>
    tpu.vector_store %arg3[%c0_2, %c0_3, %c0_4], %0 {strides = array<i32>} : memref<1x8x2048xf32, #tpu.memory_space<vmem>>, vector<1x4x1024xf32>,
    %c0_5 = arith.constant 0 : index
    %c0_6 = arith.constant 0 : index
    %c0_7 = arith.constant 0 : index
    %2 = vector.load %arg1[%c0_5, %c0_6, %c0_7] : memref<1x4x1024xf32, #tpu.memory_space<vmem>>, vector<1x4x1024xf32>
    %c0_8 = arith.constant 0 : index
    %c0_9 = arith.constant 0 : index
    %c1024 = arith.constant 1024 : index
    %3 = vector.load %arg3[%c0_8, %c0_9, %c1024] : memref<1x8x2048xf32, #tpu.memory_space<vmem>>, vector<1x4x1024xf32>
    tpu.vector_store %arg3[%c0_8, %c0_9, %c1024], %2 {strides = array<i32>} : memref<1x8x2048xf32, #tpu.memory_space<vmem>>, vector<1x4x1024xf32>,
    %c0_10 = arith.constant 0 : index
    %c0_11 = arith.constant 0 : index
    %c0_12 = arith.constant 0 : index
    %4 = vector.load %arg2[%c0_10, %c0_11, %c0_12] : memref<1x4x1024xf32, #tpu.memory_space<vmem>>, vector<1x4x1024xf32>
    %c0_13 = arith.constant 0 : index
    %c4 = arith.constant 4 : index
    %c0_14 = arith.constant 0 : index
    %5 = vector.load %arg3[%c0_13, %c4, %c0_14] : memref<1x8x2048xf32, #tpu.memory_space<vmem>>, vector<1x4x1024xf32>
    tpu.vector_store %arg3[%c0_13, %c4, %c0_14], %4 {strides = array<i32>} : memref<1x8x2048xf32, #tpu.memory_space<vmem>>, vector<1x4x1024xf32>,
    %c0_15 = arith.constant 0 : index
    %c0_16 = arith.constant 0 : index
    %c0_17 = arith.constant 0 : index
    %6 = vector.load %arg2[%c0_15, %c0_16, %c0_17] : memref<1x4x1024xf32, #tpu.memory_space<vmem>>, vector<1x4x1024xf32>
    %c0_18 = arith.constant 0 : index
    %c4_19 = arith.constant 4 : index
    %c1024_20 = arith.constant 1024 : index
    %7 = vector.load %arg3[%c0_18, %c4_19, %c1024_20] : memref<1x8x2048xf32, #tpu.memory_space<vmem>>, vector<1x4x1024xf32>
    tpu.vector_store %arg3[%c0_18, %c4_19, %c1024_20], %6 {strides = array<i32>} : memref<1x8x2048xf32, #tpu.memory_space<vmem>>, vector<1x4x1024xf32>,
    return
  }
  func.func @transform_0(%arg0: i32) -> (i32, i32, i32) {
    %c0_i32 = arith.constant 0 : i32
    %c0_i32_0 = arith.constant 0 : i32
    %c0_i32_1 = arith.constant 0 : i32
    return %arg0, %c0_i32, %c0_i32_0 : i32, i32, i32
  }
  func.func @transform_1(%arg0: i32) -> (i32, i32, i32) {
    %c0_i32 = arith.constant 0 : i32
    %c0_i32_0 = arith.constant 0 : i32
    %c0_i32_1 = arith.constant 0 : i32
    return %arg0, %c0_i32, %c0_i32_0 : i32, i32, i32
  }
  func.func @transform_2(%arg0: i32) -> (i32, i32, i32) {
    %c0_i32 = arith.constant 0 : i32
    %c0_i32_0 = arith.constant 0 : i32
    %c0_i32_1 = arith.constant 0 : i32
    return %arg0, %c0_i32, %c0_i32_0 : i32, i32, i32
  }
}

</mosaic_0001>

<llo_original>
// kernel: tpu_custom_call.1
$region0: #{tpu_custom_call.1}
  #allocation0 [shape = 'u32[]', space=smem, size = 0x4, offset = 0x4, fixed_abs, tag = 'smem constant byte address 0x4 - core index']
  #allocation1 [shape = 'u32[144,128]{1,0:T(1,128)}', space=vmem, size = 0x12000, scoped, tag = 'internal scratch']
  %s0 = inlined_call_operand.hbm [shape: f32[2,4,1024], index: 0, kind: input, shape index: {}]
  %s1 = inlined_call_operand.hbm [shape: f32[2,4,1024], index: 1, kind: input, shape index: {}]
  %s2 = inlined_call_operand.hbm [shape: f32[2,8,2048], index: 2, kind: output, shape index: {}]
  %s3 = sld [smem:[#allocation0]]
  $region49: #{tpu_custom_call.1} parent=0
    _
  %s5 = ssub.s32 1, %s3
  %s6 = scalar_select 0, %s5, %s3
  $region1: #{tpu_custom_call.1} parent=0
    #allocation2 [shape = 'u8[32768]{0}', space=vmem, size = 0x8000, scoped, tag = 'input window, operand 0']
    #allocation3 [shape = 's32[2]{0}', space=sflag, size = 0x8, scoped, tag = 'scoped memory for tpu_custom_call.1']
    #allocation4 [shape = 's32[2]{0}', space=sflag, size = 0x8, scoped, tag = 'scoped memory for tpu_custom_call.1']
    #allocation5 [shape = 'u8[32768]{0}', space=vmem, size = 0x8000, scoped, tag = 'input window, operand 1']
    #allocation6 [shape = 's32[2]{0}', space=sflag, size = 0x8, scoped, tag = 'scoped memory for tpu_custom_call.1']
    #allocation7 [shape = 'u8[131072]{0}', space=vmem, size = 0x20000, scoped, tag = 'output window, operand 0']
    %7 = vsyncpa [#allocation3], 0
    %s8 = scalar_lea.sflag [#allocation3], 1
    %9 = vsyncpa %s8, 0
    %10 = vsyncpa [#allocation6], 0
    %s11 = scalar_lea.sflag [#allocation6], 1
    %12 = vsyncpa %s11, 0
    %13 = vsyncpa [#allocation4], 0
    %s14 = scalar_lea.sflag [#allocation4], 1
    %15 = vsyncpa %s14, 0
    loop: start=0, step=1, limit=4
    $region2: #{tpu_custom_call.1} parent=1 // loop_pre_header
      _
    $region3: #{tpu_custom_call.1} parent=1 // loop_header
      %s17 = sphi 0, %s21
      %p18 = scmp.ge.s32.totalorder %s17, 4
      %s27 = sphi 0, %s29
      %s30 = sphi 0, %s27
      %s31 = sphi 0, %s30
      %s47 = sphi 0, %s31
      %s53 = sphi 0, %s55
      %s56 = sphi 0, %s53
      %s57 = sphi 0, %s56
      %s73 = sphi 0, %s57
      %s79 = sphi 0, %s81
      %s82 = sphi 0, %s79
      %s83 = sphi 0, %s82
      %s99 = sphi 0, %s83
    $region4: #{tpu_custom_call.1} parent=1 // loop_header_branch
      %20 = sbr.rel (%p18) target = $region8
    $region5: #{tpu_custom_call.1} parent=1 // loop_body
      %s22 = ssub.s32 %s17, 1
      %s23 = ssub.s32 %s17, 2
      %s24 = sadd.s32 %s17, 1
      %s25 = ssub.s32 %s17, %s24
      %p26 = scmp.eq.s32.totalorder %s25, 0
      %s28 = sadd.s32 %s27, 1
      %s29 = scalar_select %p26, %s27, %s28
      %p32 = pneg %p26
      %p33 = scmp.eq.s32.totalorder %s17, 1
      %p34 = por %p32, %p33
      %p35 = scmp.ne.s32.totalorder %s27, %s30
      %p36 = scmp.eq.s32.totalorder %s17, 0
      %p37 = por %p35, %p36
      %p38 = scmp.ne.s32.totalorder %s27, %s30
      %p39 = scmp.eq.s32.totalorder %s22, 1
      %p40 = por %p38, %p39
      %p41 = scmp.ne.s32.totalorder %s30, %s31
      %p42 = scmp.eq.s32.totalorder %s22, 0
      %p43 = por %p41, %p42
      %p44 = scmp.ne.s32.totalorder %s30, %s31
      %p45 = scmp.eq.s32.totalorder %s23, 1
      %p46 = por %p44, %p45
      %p48 = scmp.ne.s32.totalorder %s31, %s47
      %p49 = scmp.eq.s32.totalorder %s23, 0
      %p50 = por %p48, %p49
      %s51 = ssub.s32 %s17, %s24
      %p52 = scmp.eq.s32.totalorder %s51, 0
      %s54 = sadd.s32 %s53, 1
      %s55 = scalar_select %p52, %s53, %s54
      %p58 = pneg %p52
      %p59 = scmp.eq.s32.totalorder %s17, 1
      %p60 = por %p58, %p59
      %p61 = scmp.ne.s32.totalorder %s53, %s56
      %p62 = scmp.eq.s32.totalorder %s17, 0
      %p63 = por %p61, %p62
      %p64 = scmp.ne.s32.totalorder %s53, %s56
      %p65 = scmp.eq.s32.totalorder %s22, 1
      %p66 = por %p64, %p65
      %p67 = scmp.ne.s32.totalorder %s56, %s57
      %p68 = scmp.eq.s32.totalorder %s22, 0
      %p69 = por %p67, %p68
      %p70 = scmp.ne.s32.totalorder %s56, %s57
      %p71 = scmp.eq.s32.totalorder %s23, 1
      %p72 = por %p70, %p71
      %p74 = scmp.ne.s32.totalorder %s57, %s73
      %p75 = scmp.eq.s32.totalorder %s23, 0
      %p76 = por %p74, %p75
      %s77 = ssub.s32 %s17, %s24
      %p78 = scmp.eq.s32.totalorder %s77, 0
      %s80 = sadd.s32 %s79, 1
      %s81 = scalar_select %p78, %s79, %s80
      %p84 = pneg %p78
      %p85 = scmp.eq.s32.totalorder %s17, 1
      %p86 = por %p84, %p85
      %p87 = scmp.ne.s32.totalorder %s79, %s82
      %p88 = scmp.eq.s32.totalorder %s17, 0
      %p89 = por %p87, %p88
      %p90 = scmp.ne.s32.totalorder %s79, %s82
      %p91 = scmp.eq.s32.totalorder %s22, 1
      %p92 = por %p90, %p91
      %p93 = scmp.ne.s32.totalorder %s82, %s83
      %p94 = scmp.eq.s32.totalorder %s22, 0
      %p95 = por %p93, %p94
      %p96 = scmp.ne.s32.totalorder %s82, %s83
      %p97 = scmp.eq.s32.totalorder %s23, 1
      %p98 = por %p96, %p97
      %p100 = scmp.ne.s32.totalorder %s83, %s99
      %p101 = scmp.eq.s32.totalorder %s23, 0
      %p102 = por %p100, %p101
      %p103 = scmp.le.s32.totalorder 1, %s17
      %p104 = scmp.lt.s32.totalorder %s17, 3
      %p105 = pnand %p103, %p104
      %p106 = pneg %p105
      // Predicated region
      $region9: #{tpu_custom_call.1} parent=5 // pred_check
        _
      $region10: #{tpu_custom_call.1} parent=5 // pred_check_branch
        %108 = sbr.rel (%p105) target = $region12
      $region11: #{tpu_custom_call.1} parent=5 // pred_region
        %s109 = ssub.s32 %s17, 1
      $region12: #{tpu_custom_call.1} parent=5 // pred_fallthru
        _
      %p110 = scmp.lt.s32.totalorder %s17, 2
      // Predicated region
      $region13: #{tpu_custom_call.1} parent=5 // pred_check
        %p111 = pneg %p110
      $region14: #{tpu_custom_call.1} parent=5 // pred_check_branch
        %113 = sbr.rel (%p111) target = $region16
      $region15: #{tpu_custom_call.1} parent=5 // pred_region
        // Predicated region
        $region17: #{tpu_custom_call.1} parent=15 // pred_check
          %p114 = pneg %p37
        $region18: #{tpu_custom_call.1} parent=15 // pred_check_branch
          %116 = sbr.rel (%p114) target = $region20
        $region19: #{tpu_custom_call.1} parent=15 // pred_region
          %s117 = sand.u32 %s27, 1
          %s118 = scalar_lea.sflag [#allocation3], %s117
          %s119 = sand.u32 %s27, 1
          %s120 = smul.addr %s119, 32
          %s121 = scalar_lea.vmem [#allocation2], %s120
          %s123 = ssub.s32 512, 512
          %124 = vsyncadd %s118, %s123
          %s125 = smul.addr %s17, 8
          %s126 = smul.addr %s125, 64
          %s127 = scalar_lea.hbm %s0, %s126
          %s129 = sshll.u32 %s121, 4
          %s130 = int_to_ptr.vmem [resolvable:$true] %s129
          %132 = dma.hbm_to_vmem [thread:$0]  %s127, 512, %s130, %s118
        $region20: #{tpu_custom_call.1} parent=15 // pred_fallthru
          _
        // Predicated region
        $region21: #{tpu_custom_call.1} parent=15 // pred_check
          %p133 = pneg %p63
        $region22: #{tpu_custom_call.1} parent=15 // pred_check_branch
          %135 = sbr.rel (%p133) target = $region24
        $region23: #{tpu_custom_call.1} parent=15 // pred_region
          %s136 = sand.u32 %s53, 1
          %s137 = scalar_lea.sflag [#allocation6], %s136
          %s138 = sand.u32 %s53, 1
          %s139 = smul.addr %s138, 32
          %s140 = scalar_lea.vmem [#allocation5], %s139
          %s142 = ssub.s32 512, 512
          %143 = vsyncadd %s137, %s142
          %s144 = smul.addr %s17, 8
          %s145 = smul.addr %s144, 64
          %s146 = scalar_lea.hbm %s1, %s145
          %s148 = sshll.u32 %s140, 4
          %s149 = int_to_ptr.vmem [resolvable:$true] %s148
          %151 = dma.hbm_to_vmem [thread:$0]  %s146, 512, %s149, %s137
        $region24: #{tpu_custom_call.1} parent=15 // pred_fallthru
          _
      $region16: #{tpu_custom_call.1} parent=5 // pred_fallthru
        _
      %p152 = scmp.le.s32.totalorder 1, %s17
      %p153 = scmp.lt.s32.totalorder %s17, 3
      %p154 = pnand %p152, %p153
      %p155 = pneg %p154
      // Predicated region
      $region25: #{tpu_custom_call.1} parent=5 // pred_check
        _
      $region26: #{tpu_custom_call.1} parent=5 // pred_check_branch
        %157 = sbr.rel (%p154) target = $region28
      $region27: #{tpu_custom_call.1} parent=5 // pred_region
        %s158 = ssub.s32 %s17, 1
        %s159 = sand.u32 %s30, 1
        %s160 = scalar_lea.sflag [#allocation3], %s159
        %s161 = sand.u32 %s30, 1
        %s162 = smul.addr %s161, 32
        %s163 = scalar_lea.vmem [#allocation2], %s162
        // Predicated region
        $region29: #{tpu_custom_call.1} parent=27 // pred_check
          %p164 = pneg %p43
        $region30: #{tpu_custom_call.1} parent=27 // pred_check_branch
          %166 = sbr.rel (%p164) target = $region32
        $region31: #{tpu_custom_call.1} parent=27 // pred_region
          %167 = dma.done %s160, 512
        $region32: #{tpu_custom_call.1} parent=27 // pred_fallthru
          _
        %s168 = sand.u32 %s56, 1
        %s169 = scalar_lea.sflag [#allocation6], %s168
        %s170 = sand.u32 %s56, 1
        %s171 = smul.addr %s170, 32
        %s172 = scalar_lea.vmem [#allocation5], %s171
        // Predicated region
        $region33: #{tpu_custom_call.1} parent=27 // pred_check
          %p173 = pneg %p69
        $region34: #{tpu_custom_call.1} parent=27 // pred_check_branch
          %175 = sbr.rel (%p173) target = $region36
        $region35: #{tpu_custom_call.1} parent=27 // pred_region
          %176 = dma.done %s169, 512
        $region36: #{tpu_custom_call.1} parent=27 // pred_fallthru
          _
        %s177 = sand.u32 %s30, 1
        %s178 = scalar_lea.sflag [#allocation3], %s177
        %s179 = sand.u32 %s30, 1
        %s180 = smul.addr %s179, 32
        %s181 = scalar_lea.vmem [#allocation2], %s180
        %p182 = pneg %p43
        %p183 = pneg %p40
        %s184 = sand.u32 %s56, 1
        %s185 = scalar_lea.sflag [#allocation6], %s184
        %s186 = sand.u32 %s56, 1
        %s187 = smul.addr %s186, 32
        %s188 = scalar_lea.vmem [#allocation5], %s187
        %p189 = pneg %p69
        %p190 = pneg %p66
        %p191 = pneg %p95
        %p192 = pneg %p92
        %s193 = sand.u32 %s82, 1
        %s194 = scalar_lea.sflag [#allocation4], %s193
        %s195 = sand.u32 %s82, 1
        %s196 = smul.addr %s195, 128
        %s197 = scalar_lea.vmem [#allocation7], %s196
        %v198 = vld [vmem:[%s163] sm:$0xff]
        %v199 = vld [vmem:[%s163 + $0x8] sm:$0xff]
        %v200 = vld [vmem:[%s163 + $0x10] sm:$0xff]
        %v201 = vld [vmem:[%s163 + $0x18] sm:$0xff]
        %v206 = vcombine.high %v198, %v198
        %v207 = vcombine.high %v199, %v199
        %v208 = vcombine.high %v200, %v200
        %v209 = vcombine.high %v201, %v201
        %214 = vst [vmem:[%s197] sm:$0xf] %v198
        %215 = vst [vmem:[%s197 + $0x8] sm:$0xf] %v206
        %216 = vst [vmem:[%s197 + $0x10] sm:$0xf] %v199
        %217 = vst [vmem:[%s197 + $0x18] sm:$0xf] %v207
        %218 = vst [vmem:[%s197 + $0x20] sm:$0xf] %v200
        %219 = vst [vmem:[%s197 + $0x28] sm:$0xf] %v208
        %220 = vst [vmem:[%s197 + $0x30] sm:$0xf] %v201
        %221 = vst [vmem:[%s197 + $0x38] sm:$0xf] %v209
        %v222 = vld [vmem:[%s163] sm:$0xff]
        %v223 = vld [vmem:[%s163 + $0x8] sm:$0xff]
        %v224 = vld [vmem:[%s163 + $0x10] sm:$0xff]
        %v225 = vld [vmem:[%s163 + $0x18] sm:$0xff]
        %v230 = vcombine.high %v222, %v222
        %v231 = vcombine.high %v223, %v223
        %v232 = vcombine.high %v224, %v224
        %v233 = vcombine.high %v225, %v225
        %238 = vst [vmem:[%s197 + $0x40] sm:$0xf] %v222
        %239 = vst [vmem:[%s197 + $0x48] sm:$0xf] %v230
        %240 = vst [vmem:[%s197 + $0x50] sm:$0xf] %v223
        %241 = vst [vmem:[%s197 + $0x58] sm:$0xf] %v231
        %242 = vst [vmem:[%s197 + $0x60] sm:$0xf] %v224
        %243 = vst [vmem:[%s197 + $0x68] sm:$0xf] %v232
        %244 = vst [vmem:[%s197 + $0x70] sm:$0xf] %v225
        %245 = vst [vmem:[%s197 + $0x78] sm:$0xf] %v233
        %v246 = vld [vmem:[%s172] sm:$0xff]
        %v247 = vld [vmem:[%s172 + $0x8] sm:$0xff]
        %v248 = vld [vmem:[%s172 + $0x10] sm:$0xff]
        %v249 = vld [vmem:[%s172 + $0x18] sm:$0xff]
        %v254 = vcombine.low %v246, %v246
        %v255 = vcombine.low %v247, %v247
        %v256 = vcombine.low %v248, %v248
        %v257 = vcombine.low %v249, %v249
        %262 = vst [vmem:[%s197] sm:$0xf0] %v254
        %263 = vst [vmem:[%s197 + $0x8] sm:$0xf0] %v246
        %264 = vst [vmem:[%s197 + $0x10] sm:$0xf0] %v255
        %265 = vst [vmem:[%s197 + $0x18] sm:$0xf0] %v247
        %266 = vst [vmem:[%s197 + $0x20] sm:$0xf0] %v256
        %267 = vst [vmem:[%s197 + $0x28] sm:$0xf0] %v248
        %268 = vst [vmem:[%s197 + $0x30] sm:$0xf0] %v257
        %269 = vst [vmem:[%s197 + $0x38] sm:$0xf0] %v249
        %v270 = vld [vmem:[%s172] sm:$0xff]
        %v271 = vld [vmem:[%s172 + $0x8] sm:$0xff]
        %v272 = vld [vmem:[%s172 + $0x10] sm:$0xff]
        %v273 = vld [vmem:[%s172 + $0x18] sm:$0xff]
        %v278 = vcombine.low %v270, %v270
        %v279 = vcombine.low %v271, %v271
        %v280 = vcombine.low %v272, %v272
        %v281 = vcombine.low %v273, %v273
        %286 = vst [vmem:[%s197 + $0x40] sm:$0xf0] %v278
        %287 = vst [vmem:[%s197 + $0x48] sm:$0xf0] %v270
        %288 = vst [vmem:[%s197 + $0x50] sm:$0xf0] %v279
        %289 = vst [vmem:[%s197 + $0x58] sm:$0xf0] %v271
        %290 = vst [vmem:[%s197 + $0x60] sm:$0xf0] %v280
        %291 = vst [vmem:[%s197 + $0x68] sm:$0xf0] %v272
        %292 = vst [vmem:[%s197 + $0x70] sm:$0xf0] %v281
        %293 = vst [vmem:[%s197 + $0x78] sm:$0xf0] %v273
        %s294 = sand.u32 %s82, 1
        %s295 = scalar_lea.sflag [#allocation4], %s294
        %s296 = sand.u32 %s82, 1
        %s297 = smul.addr %s296, 128
        %s298 = scalar_lea.vmem [#allocation7], %s297
        // Predicated region
        $region37: #{tpu_custom_call.1} parent=27 // pred_check
          %p299 = pneg %p92
        $region38: #{tpu_custom_call.1} parent=27 // pred_check_branch
          %301 = sbr.rel (%p299) target = $region40
        $region39: #{tpu_custom_call.1} parent=27 // pred_region
          %s303 = ssub.s32 2048, 2048
          %304 = vsyncadd %s295, %s303
          %s305 = smul.addr %s22, 16
          %s306 = smul.addr %s305, 128
          %s307 = scalar_lea.hbm %s2, %s306
          %s309 = sshll.u32 %s298, 4
          %s310 = int_to_ptr.vmem [resolvable:$true] %s309
          %312 = dma.vmem_to_hbm [thread:$0]  %s310, 2048, %s307, %s295
        $region40: #{tpu_custom_call.1} parent=27 // pred_fallthru
          _
      $region28: #{tpu_custom_call.1} parent=5 // pred_fallthru
        _
      %p313 = scmp.le.s32.totalorder 2, %s17
      // Predicated region
      $region41: #{tpu_custom_call.1} parent=5 // pred_check
        %p314 = pneg %p313
      $region42: #{tpu_custom_call.1} parent=5 // pred_check_branch
        %316 = sbr.rel (%p314) target = $region44
      $region43: #{tpu_custom_call.1} parent=5 // pred_region
        %s317 = ssub.s32 %s17, 2
        // Predicated region
        $region45: #{tpu_custom_call.1} parent=43 // pred_check
          %p318 = pneg %p98
        $region46: #{tpu_custom_call.1} parent=43 // pred_check_branch
          %320 = sbr.rel (%p318) target = $region48
        $region47: #{tpu_custom_call.1} parent=43 // pred_region
          %s321 = sand.u32 %s83, 1
          %s322 = scalar_lea.sflag [#allocation4], %s321
          %s323 = sand.u32 %s83, 1
          %s324 = smul.addr %s323, 128
          %s325 = scalar_lea.vmem [#allocation7], %s324
          %326 = dma.done %s322, 2048
        $region48: #{tpu_custom_call.1} parent=43 // pred_fallthru
          _
      $region44: #{tpu_custom_call.1} parent=5 // pred_fallthru
        _
    $region6: #{tpu_custom_call.1} parent=1 // loop_footer
      %s21 = sadd.s32 1, %s17
    $region7: #{tpu_custom_call.1} parent=1 // loop_footer_branch
      %16 = sbr.rel target = $region3
    $region8: #{tpu_custom_call.1} parent=1 // loop_exit
      _
    %327 = vsyncpa [#allocation3], 1
    %s328 = scalar_lea.sflag [#allocation3], 1
    %329 = vsyncpa %s328, 1
    %330 = vsyncpa [#allocation6], 1
    %s331 = scalar_lea.sflag [#allocation6], 1
    %332 = vsyncpa %s331, 1
    %333 = vsyncpa [#allocation4], 1
    %s334 = scalar_lea.sflag [#allocation4], 1
    %335 = vsyncpa %s334, 1

</llo_original>
